<compile_context>
chip_gen: v6e
topology: v6e:2x2x1
jax: 0.10.0
libtpu: 0.0.40
codegen_flags: <defaults>
</compile_context>

<pallas_src>
import functools

import jax
import jax.numpy as jnp
from jax import lax
from jax.experimental import pallas as pl
from jax.experimental.pallas import tpu as pltpu

K_SA = 7                       # SpatialAttention kernel_size
PAD = K_SA // 2                # padding = 3


def _pick_vmem_limit():
    # Per-generation scoped-VMEM limit (review item): large parts (v5e/v6e,
    # 128 MiB physical) get 96 MiB; v7x (64 MiB physical) gets 48 MiB.
    cap = 64 * 1024 * 1024
    try:
        cap = int(pltpu.get_tpu_info().vmem_capacity_bytes)
    except Exception:
        pass
    if cap >= 128 * 1024 * 1024:
        return 96 * 1024 * 1024
    return 48 * 1024 * 1024


_VMEM_LIMIT = _pick_vmem_limit()


# ================== Fused kernel: SEBlock + 1x1 conv (selayer=True) ==========
# Per batch image, on the lane-dense (C, P=H*W) view:
#   ca  = sigmoid(fc(avgpool(x)) + fc(maxpool(x)))          (ChannelAttention)
#   o   = ca * x
#   sa  = sigmoid(conv7x7([mean_c(o); max_c(o)]))           (SpatialAttention)
#   se  = relu(sa * o + x)
#   y   = W_conv @ se                                        (1x1 conv, fused)
def _fused_se_conv_kernel(x_ref, w1t_ref, w2_ref, wc_ref, wsa_ref, y_ref,
                          ext_ref, *, w, cdt):
    xs = x_ref[0]                                   # (C, P) f32, lane-dense
    c, p = xs.shape

    # ---------------- ChannelAttention ----------------
    avg = jnp.sum(xs, axis=1, keepdims=True) * (1.0 / p)     # (C, 1) spatial mean
    mx = jnp.max(xs, axis=1, keepdims=True)                  # (C, 1) spatial max
    w1t = w1t_ref[...]                                       # (C, Chid) = fc[0].weight.T
    w2 = w2_ref[...]                                         # (C, Chid) = fc[2].weight
    # fc(avg) + fc(max) = W2 @ (relu(W1@avg) + relu(W1@max)) -> shared 2nd stage
    h_a = jnp.maximum(jnp.sum(w1t * avg, axis=0, keepdims=True), 0.0)   # (1, Chid)
    h_m = jnp.maximum(jnp.sum(w1t * mx, axis=0, keepdims=True), 0.0)    # (1, Chid)
    ca = jax.nn.sigmoid(jnp.sum(w2 * (h_a + h_m), axis=1, keepdims=True))  # (C, 1)
    o = xs * ca                                              # (C, P)

    # ---------------- SpatialAttention (flat pixel domain) ----------------
    avg_sp = jnp.sum(o, axis=0, keepdims=True) * (1.0 / c)   # (1, P) channel mean
    max_sp = jnp.max(o, axis=0, keepdims=True)               # (1, P) channel max

    base = PAD * w + PAD                                     # zero-extension offset
    ext_ref[...] = jnp.zeros_like(ext_ref)                   # tiny border zero-fill
    ext_ref[0:1, base:base + p] = avg_sp
    ext_ref[1:2, base:base + p] = max_sp

    # Column-validity masks per horizontal tap (row validity is handled by the
    # zero extension of the flat map).
    col = lax.broadcasted_iota(jnp.int32, (1, p), 1) % w     # output column j
    masks = [jnp.logical_and(col >= PAD - dx, col < w + PAD - dx)
             for dx in range(K_SA)]

    acc = jnp.zeros((1, p), jnp.float32)
    for ci in range(2):
        ext = ext_ref[ci:ci + 1, :]                          # (1, P + 6W + 6), aligned load
        # 7 row-shifted full-width views, reused across kx (7 lane slices)
        rows = [ext[:, dy * w: dy * w + p + 2 * PAD] for dy in range(K_SA)]
        for dx in range(K_SA):
            s = rows[0] * wsa_ref[ci * K_SA * K_SA + dx]     # SMEM scalar weights
            for dy in range(1, K_SA):
                s = s + rows[dy] * wsa_ref[ci * K_SA * K_SA + dy * K_SA + dx]
            contrib = s[:, dx:dx + p]                        # 1 lane slice per kx
            if dx == PAD:
                acc = acc + contrib                          # center tap: always valid
            else:
                acc = acc + jnp.where(masks[dx], contrib, 0.0)
    sa = jax.nn.sigmoid(acc)                                 # (1, P)

    # ---------------- residual + ReLU, then fused 1x1 conv (MXU) -------------
    se = jnp.maximum(o * sa + xs, 0.0)                       # (C, P)
    y = jnp.dot(wc_ref[...].astype(cdt), se.astype(cdt),
                preferred_element_type=jnp.float32)          # (Cout, P), f32 accum
    y_ref[0] = y.astype(y_ref.dtype)


def fused_se_conv(x, w1, w2, w_sa, w_conv, *, compute_dtype=jnp.float32):
    # x: (N, C, H, W); w1: (Chid, C) = fc[0].weight; w2: (C, Chid) = fc[2].weight
    # w_sa: (1, 2, 7, 7) = SpatialAttention.conv1.weight; w_conv: (Cout, C)
    n, c, hh, ww = x.shape
    p = hh * ww
    cout = w_conv.shape[0]
    chid = w1.shape[0]
    x3 = x.reshape(n, c, p)                 # free reshape (contiguous), no transpose
    w1t = jnp.transpose(w1)                 # (C, Chid), tiny host-side transpose
    wsa_flat = w_sa.reshape(-1)             # (2*7*7,), ordered [ci, ky, kx]
    base = PAD * ww + PAD

    kernel = functools.partial(_fused_se_conv_kernel, w=ww, cdt=compute_dtype)
    y = pl.pallas_call(
        kernel,
        out_shape=jax.ShapeDtypeStruct((n, cout, p), x.dtype),
        grid=(n,),
        in_specs=[
            pl.BlockSpec((1, c, p), lambda b: (b, 0, 0)),        # lane-dense image block
            pl.BlockSpec((c, chid), lambda b: (0, 0)),           # resident CA weights
            pl.BlockSpec((c, chid), lambda b: (0, 0)),
            pl.BlockSpec((cout, c), lambda b: (0, 0)),           # resident conv weight
            pl.BlockSpec(memory_space=pltpu.MemorySpace.SMEM),   # 7x7 weights as scalars
        ],
        out_specs=pl.BlockSpec((1, cout, p), lambda b: (b, 0, 0)),
        scratch_shapes=[pltpu.VMEM((2, p + 2 * base), jnp.float32)],
        compiler_params=pltpu.CompilerParams(
            dimension_semantics=("parallel",),
            vmem_limit_bytes=_VMEM_LIMIT),
    )(x3, w1t, w2, w_conv, wsa_flat)
    return y.reshape(n, cout, hh, ww)


# ============ Kernel 2: 1x1 conv, weight-stationary (selayer=False) ==========
def _conv1x1_kernel(x_ref, w_ref, o_ref):
    # x_ref: (B, Cin, TP); w_ref: (Cout, Cin); o_ref: (B, Cout, TP) (lane-dense)
    wmat = w_ref[...]
    for b in range(x_ref.shape[0]):         # static, unrolled over images in the block
        o_ref[b] = jnp.dot(wmat, x_ref[b],
                           preferred_element_type=jnp.float32).astype(o_ref.dtype)


def conv1x1(x_ncp, w_oi, *, out_dtype=jnp.float32, compute_dtype=jnp.float32,
            target_lanes=2048):
    # x_ncp: (N, Cin, P) — NCHW with H,W flattened.  w_oi: (Cout, Cin).
    n, cin, p = x_ncp.shape
    cout = w_oi.shape[0]
    tile_p = min(target_lanes, p)
    # Amortize the ~0.35 us per-grid-step cost at small H*W: pack several
    # images per step so each step moves >= ~target_lanes pixels.
    bn = min(n, max(1, target_lanes // p)) if p < target_lanes else 1
    grid = (pl.cdiv(n, bn), pl.cdiv(p, tile_p))
    # NOTE: the bf16 cast here is a separate XLA op in this standalone demo; in
    # a real model the producer would emit bf16 directly (halving HBM reads).
    return pl.pallas_call(
        _conv1x1_kernel,
        out_shape=jax.ShapeDtypeStruct((n, cout, p), out_dtype),
        grid=grid,
        in_specs=[
            pl.BlockSpec((bn, cin, tile_p), lambda i, j: (i, 0, j)),
            pl.BlockSpec((cout, cin), lambda i, j: (0, 0)),      # resident weight
        ],
        out_specs=pl.BlockSpec((bn, cout, tile_p), lambda i, j: (i, 0, j)),
        compiler_params=pltpu.CompilerParams(
            dimension_semantics=("parallel", "parallel"),
            vmem_limit_bytes=_VMEM_LIMIT),
    )(x_ncp.astype(compute_dtype), w_oi.astype(compute_dtype))


# ------------------------------ ShortCut module ------------------------------
def init_shortcut_params(key, in_channels, out_channels, selayer=False):
    # ShortCut.__init__ re-inits every nn.Conv2d inside self.conv1 with
    # nn.init.normal_(weight, std=0.001) -- including the SEBlock convs.
    std = 0.001
    k0, k1, k2, k3 = jax.random.split(key, 4)
    params = {
        # nn.Conv2d(in, out, 1, bias=False): weight (out, in, 1, 1) -> (out, in)
        "conv_w": std * jax.random.normal(k0, (out_channels, in_channels), jnp.float32),
    }
    if selayer:
        chid = in_channels // 16            # hardcoded //16 in ChannelAttention
        params["ca_w1"] = std * jax.random.normal(k1, (chid, in_channels), jnp.float32)
        params["ca_w2"] = std * jax.random.normal(k2, (in_channels, chid), jnp.float32)
        params["sa_w"] = std * jax.random.normal(k3, (1, 2, K_SA, K_SA), jnp.float32)
    return params


def shortcut_forward(params, x, selayer=False, compute_dtype=jnp.float32):
    # x: (N, Cin, H, W) float32 (NCHW, as PyTorch)
    n, c, hh, ww = x.shape
    if selayer:
        return fused_se_conv(x, params["ca_w1"], params["ca_w2"], params["sa_w"],
                             params["conv_w"], compute_dtype=compute_dtype)
    y = conv1x1(x.reshape(n, c, hh * ww), params["conv_w"],
                out_dtype=x.dtype, compute_dtype=compute_dtype)
    return y.reshape(n, -1, hh, ww)


# ------------------------------ pure-JAX reference ---------------------------
def shortcut_reference(params, x, selayer=False):
    if selayer:
        avg = jnp.mean(x, axis=(2, 3))
        mx = jnp.max(x, axis=(2, 3))
        w1, w2 = params["ca_w1"], params["ca_w2"]

        def fc(p):
            h = jnp.maximum(p @ w1.T, 0.0)
            return h @ w2.T

        ca = jax.nn.sigmoid(fc(avg) + fc(mx))[:, :, None, None]
        out = ca * x
        avg_sp = jnp.mean(out, axis=1, keepdims=True)
        max_sp = jnp.max(out, axis=1, keepdims=True)
        sp = jnp.concatenate([avg_sp, max_sp], axis=1)
        conv = lax.conv_general_dilated(
            sp, params["sa_w"], window_strides=(1, 1), padding="SAME",
            dimension_numbers=("NCHW", "OIHW", "NCHW"),
            precision=lax.Precision.HIGHEST)
        sa = jax.nn.sigmoid(conv)
        out = sa * out
        x = jnp.maximum(out + x, 0.0)
    return jnp.einsum("oc,nchw->nohw", params["conv_w"], x,
                      precision=lax.Precision.HIGHEST)


if __name__ == "__main__":
    key = jax.random.PRNGKey(0)
    kx_, kp1, kp2 = jax.random.split(key, 3)
    N, Cin, Cout, H, W = 2, 32, 16, 16, 16          # Cin >= 16 so Cin//16 >= 1
    x = jax.random.normal(kx_, (N, Cin, H, W), jnp.float32)

    # --- default path: selayer=False (plain 1x1 conv) ---
    p_plain = init_shortcut_params(kp1, Cin, Cout, selayer=False)
    y_plain = jax.block_until_ready(shortcut_forward(p_plain, x, selayer=False))
    y_plain_ref = shortcut_reference(p_plain, x, selayer=False)
    assert y_plain.shape == (N, Cout, H, W)
    assert jnp.allclose(y_plain, y_plain_ref, rtol=2e-2, atol=1e-5), "selayer=False mismatch"

    # --- selayer=True path: single fused SEBlock + 1x1 conv kernel ---
    p_se = init_shortcut_params(kp2, Cin, Cout, selayer=True)
    y_se = jax.block_until_ready(shortcut_forward(p_se, x, selayer=True))
    y_se_ref = shortcut_reference(p_se, x, selayer=True)
    assert y_se.shape == (N, Cout, H, W)
    assert jnp.allclose(y_se, y_se_ref, rtol=2e-2, atol=1e-5), "selayer=True mismatch"

    # --- bf16 matmul-operand variants (mem-bound paths; f32 accumulation) ---
    y_plain_bf = jax.block_until_ready(
        shortcut_forward(p_plain, x, selayer=False, compute_dtype=jnp.bfloat16))
    assert jnp.allclose(y_plain_bf, y_plain_ref, rtol=2e-2, atol=5e-4), "bf16 plain mismatch"
    y_se_bf = jax.block_until_ready(
        shortcut_forward(p_se, x, selayer=True, compute_dtype=jnp.bfloat16))
    assert jnp.allclose(y_se_bf, y_se_ref, rtol=2e-2, atol=5e-4), "bf16 selayer mismatch"

    print("KERNEL_OK")
</pallas_src>

<mosaic_0001>
module attributes {stable_mosaic.version = 11 : i64} {
  func.func @_conv1x1_kernel(%arg0: i32, %arg1: i32, %arg2: memref<2x32x256xf32, #tpu.memory_space<vmem>>, %arg3: memref<16x32xf32, #tpu.memory_space<vmem>>, %arg4: memref<2x16x256xf32, #tpu.memory_space<vmem>>) attributes {dimension_semantics = [#tpu.dimension_semantics<parallel>, #tpu.dimension_semantics<parallel>], iteration_bounds = array<i64: 1, 1>, scalar_prefetch = 0 : i64, scratch_operands = 0 : i64, tpu.core_type = #tpu.core_type<tc>, window_params = [{transform_indices = @transform_0, window_bounds = array<i64: 2, 32, 256>}, {pipeline_mode = #tpu.pipeline_mode<synchronous>, transform_indices = @transform_1, window_bounds = array<i64: 16, 32>}, {transform_indices = @transform_2, window_bounds = array<i64: 2, 16, 256>}]} {
    %c0 = arith.constant 0 : index
    %c0_0 = arith.constant 0 : index
    %0 = vector.load %arg3[%c0, %c0_0] : memref<16x32xf32, #tpu.memory_space<vmem>>, vector<16x32xf32>
    %c0_1 = arith.constant 0 : index
    %c0_2 = arith.constant 0 : index
    %c0_3 = arith.constant 0 : index
    %1 = vector.load %arg2[%c0_1, %c0_2, %c0_3] : memref<2x32x256xf32, #tpu.memory_space<vmem>>, vector<1x32x256xf32>
    %2 = vector.shape_cast %1 : vector<1x32x256xf32> to vector<32x256xf32>
    %cst = arith.constant dense<0.000000e+00> : vector<16x256xf32>
    %3 = tpu.matmul %0, %2, %cst {dimension_numbers = #tpu.dot_dimension_numbers<[1], [0], [0], [1], [0, 0, 1, 1], [], []>} : vector<16x32xf32>, vector<32x256xf32>, vector<16x256xf32> -> vector<16x256xf32>
    %c0_4 = arith.constant 0 : index
    %c0_5 = arith.constant 0 : index
    %c0_6 = arith.constant 0 : index
    %4 = vector.load %arg4[%c0_4, %c0_5, %c0_6] : memref<2x16x256xf32, #tpu.memory_space<vmem>>, vector<1x16x256xf32>
    %5 = vector.shape_cast %4 : vector<1x16x256xf32> to vector<16x256xf32>
    %6 = vector.shape_cast %3 : vector<16x256xf32> to vector<1x16x256xf32>
    tpu.vector_store %arg4[%c0_4, %c0_5, %c0_6], %6 {strides = array<i32>} : memref<2x16x256xf32, #tpu.memory_space<vmem>>, vector<1x16x256xf32>,
    %c1 = arith.constant 1 : index
    %c0_7 = arith.constant 0 : index
    %c0_8 = arith.constant 0 : index
    %7 = vector.load %arg2[%c1, %c0_7, %c0_8] : memref<2x32x256xf32, #tpu.memory_space<vmem>>, vector<1x32x256xf32>
    %8 = vector.shape_cast %7 : vector<1x32x256xf32> to vector<32x256xf32>
    %cst_9 = arith.constant dense<0.000000e+00> : vector<16x256xf32>
    %9 = tpu.matmul %0, %8, %cst_9 {dimension_numbers = #tpu.dot_dimension_numbers<[1], [0], [0], [1], [0, 0, 1, 1], [], []>} : vector<16x32xf32>, vector<32x256xf32>, vector<16x256xf32> -> vector<16x256xf32>
    %c1_10 = arith.constant 1 : index
    %c0_11 = arith.constant 0 : index
    %c0_12 = arith.constant 0 : index
    %10 = vector.load %arg4[%c1_10, %c0_11, %c0_12] : memref<2x16x256xf32, #tpu.memory_space<vmem>>, vector<1x16x256xf32>
    %11 = vector.shape_cast %10 : vector<1x16x256xf32> to vector<16x256xf32>
    %12 = vector.shape_cast %9 : vector<16x256xf32> to vector<1x16x256xf32>
    tpu.vector_store %arg4[%c1_10, %c0_11, %c0_12], %12 {strides = array<i32>} : memref<2x16x256xf32, #tpu.memory_space<vmem>>, vector<1x16x256xf32>,
    return
  }
  func.func @transform_0(%arg0: i32, %arg1: i32) -> (i32, i32, i32) {
    %c0_i32 = arith.constant 0 : i32
    %c0_i32_0 = arith.constant 0 : i32
    return %arg0, %c0_i32, %arg1 : i32, i32, i32
  }
  func.func @transform_1(%arg0: i32, %arg1: i32) -> (i32, i32) {
    %c0_i32 = arith.constant 0 : i32
    %c0_i32_0 = arith.constant 0 : i32
    %c0_i32_1 = arith.constant 0 : i32
    return %c0_i32, %c0_i32_0 : i32, i32
  }
  func.func @transform_2(%arg0: i32, %arg1: i32) -> (i32, i32, i32) {
    %c0_i32 = arith.constant 0 : i32
    %c0_i32_0 = arith.constant 0 : i32
    return %arg0, %c0_i32, %arg1 : i32, i32, i32
  }
}

</mosaic_0001>

<llo_original>
// kernel: tpu_custom_call.1
$region0: #{tpu_custom_call.1}
  #allocation0 [shape = 'u32[]', space=smem, size = 0x4, offset = 0x4, fixed_abs, tag = 'smem constant byte address 0x4 - core index']
  #allocation1 [shape = 'u32[144,128]{1,0:T(1,128)}', space=vmem, size = 0x12000, scoped, tag = 'internal scratch']
  %s0 = inlined_call_operand.hbm [shape: f32[2,32,256], index: 0, kind: input, shape index: {}]
  %s1 = inlined_call_operand.hbm [shape: f32[16,32], index: 1, kind: input, shape index: {}]
  %s2 = inlined_call_operand.hbm [shape: f32[2,16,256], index: 2, kind: output, shape index: {}]
  %s3 = sld [smem:[#allocation0]]
  $region26: #{tpu_custom_call.1} parent=0
    _
  %s5 = ssub.s32 1, %s3
  %s6 = scalar_select 0, %s5, %s3
  $region1: #{tpu_custom_call.1} parent=0
    #allocation2 [shape = 'u8[65536]{0}', space=vmem, size = 0x10000, scoped, tag = 'input window, operand 0, single buffered']
    #allocation3 [shape = 's32[1]{0}', space=sflag, size = 0x4, scoped, tag = 'scoped memory for tpu_custom_call.1']
    #allocation4 [shape = 's32[1]{0}', space=sflag, size = 0x4, scoped, tag = 'scoped memory for tpu_custom_call.1']
    #allocation5 [shape = 'u8[8192]{0}', space=vmem, size = 0x2000, scoped, tag = 'input window, operand 1, single buffered']
    #allocation6 [shape = 's32[1]{0}', space=sflag, size = 0x4, scoped, tag = 'scoped memory for tpu_custom_call.1']
    #allocation7 [shape = 'u8[32768]{0}', space=vmem, size = 0x8000, scoped, tag = 'output window, operand 0, single buffered']
    %7 = vsyncpa [#allocation3], 0
    %8 = vsyncpa [#allocation6], 0
    %9 = vsyncpa [#allocation4], 0
    // Predicated region
    $region2: #{tpu_custom_call.1} parent=1 // pred_check
      _
    $region3: #{tpu_custom_call.1} parent=1 // pred_check_branch
      %11 = sbr.rel (0) target = $region5
    $region4: #{tpu_custom_call.1} parent=1 // pred_region
      %s13 = ssub.s32 2048, 2048
      %14 = vsyncadd [#allocation3], %s13
      %s15 = sshll.u32 [#allocation2], 4
      %s16 = int_to_ptr.vmem [resolvable:$true] %s15
      %21 = dma.hbm_to_vmem [thread:$0]  %s0, 2048, %s16, [#allocation3], 256, 256, 16
    $region5: #{tpu_custom_call.1} parent=1 // pred_fallthru
      _
    // Predicated region
    $region6: #{tpu_custom_call.1} parent=1 // pred_check
      _
    $region7: #{tpu_custom_call.1} parent=1 // pred_check_branch
      %23 = sbr.rel (0) target = $region9
    $region8: #{tpu_custom_call.1} parent=1 // pred_region
      %s25 = ssub.s32 256, 256
      %26 = vsyncadd [#allocation6], %s25
      %s27 = sshll.u32 [#allocation5], 4
      %s28 = int_to_ptr.vmem [resolvable:$true] %s27
      %33 = dma.hbm_to_vmem [thread:$0]  %s1, 256, %s28, [#allocation6], 128, 128, 8
    $region9: #{tpu_custom_call.1} parent=1 // pred_fallthru
      _
    // Predicated region
    $region10: #{tpu_custom_call.1} parent=1 // pred_check
      _
    $region11: #{tpu_custom_call.1} parent=1 // pred_check_branch
      %35 = sbr.rel (0) target = $region13
    $region12: #{tpu_custom_call.1} parent=1 // pred_region
      %36 = dma.done [#allocation3], 2048
    $region13: #{tpu_custom_call.1} parent=1 // pred_fallthru
      _
    // Predicated region
    $region14: #{tpu_custom_call.1} parent=1 // pred_check
      _
    $region15: #{tpu_custom_call.1} parent=1 // pred_check_branch
      %38 = sbr.rel (0) target = $region17
    $region16: #{tpu_custom_call.1} parent=1 // pred_region
      %39 = dma.done [#allocation6], 256
    $region17: #{tpu_custom_call.1} parent=1 // pred_fallthru
      _
    %v40 = vld [vmem:[#allocation5] sm:$0xff]
    %v41 = vld [vmem:[#allocation5 + $0x8] sm:$0xff]
    %v42 = vld [vmem:[#allocation2] sm:$0xff]
    %v43 = vld [vmem:[#allocation2 + $0x8] sm:$0xff]
    %v44 = vld [vmem:[#allocation2 + $0x10] sm:$0xff]
    %v45 = vld [vmem:[#allocation2 + $0x18] sm:$0xff]
    %v46 = vld [vmem:[#allocation2 + $0x20] sm:$0xff]
    %v47 = vld [vmem:[#allocation2 + $0x28] sm:$0xff]
    %v48 = vld [vmem:[#allocation2 + $0x30] sm:$0xff]
    %v49 = vld [vmem:[#allocation2 + $0x38] sm:$0xff]
    %vm50 = vcmask 261120
    %v52 = vsel %vm50, %v40, 0
    %v55 = vsel %vm50, %v41, 0
    %57 = vmatprep.subr.mxu0 0.0
    %58 = vmatpush1.msra.mxu0 0.0
    %59 = vmatprep.subr.mxu0 0.0
    %60 = vmatpush1.msra.mxu0 0.0
    %61 = vmatprep.subr.mxu0 0.0
    %62 = vmatpush1.msra.mxu0 0.0
    %63 = vmatprep.subr.mxu0 0.0
    %64 = vmatpush1.msra.mxu0 0.0
    %65 = vmatprep.subr.mxu0 0.0
    %66 = vmatpush1.msra.mxu0 0.0
    %67 = vmatprep.subr.mxu0 0.0
    %68 = vmatpush1.msra.mxu0 0.0
    %69 = vmatprep.subr.mxu0 0.0
    %70 = vmatpush1.msra.mxu0 0.0
    %71 = vmatprep.subr.mxu0 0.0
    %72 = vmatpush1.msra.mxu0 0.0
    %73 = vmatprep.subr.mxu0 0.0
    %74 = vmatpush1.msra.mxu0 0.0
    %75 = vmatprep.subr.mxu0 0.0
    %76 = vmatpush1.msra.mxu0 0.0
    %77 = vmatprep.subr.mxu0 0.0
    %78 = vmatpush1.msra.mxu0 0.0
    %79 = vmatprep.subr.mxu0 0.0
    %80 = vmatpush1.msra.mxu0 0.0
    %81 = vmatprep.subr.mxu0 %v49
    %82 = vmatpush1.msra.mxu0 %v48
    %83 = vmatprep.subr.mxu0 %v47
    %84 = vmatpush1.msra.mxu0 %v46
    %85 = vmatprep.subr.mxu0 %v45
    %86 = vmatpush1.msra.mxu0 %v44
    %87 = vmatprep.subr.mxu0 %v43
    %88 = vmatpush1.msra.mxu0 %v42
    %89 = vmatprep.subr.mxu0 0.0
    %90 = vmatpush2.msra.mxu0 0.0
    %91 = vmatprep.subr.mxu0 0.0
    %92 = vmatpush2.msra.mxu0 0.0
    %93 = vmatprep.subr.mxu0 0.0
    %94 = vmatpush2.msra.mxu0 0.0
    %95 = vmatprep.subr.mxu0 0.0
    %96 = vmatpush2.msra.mxu0 0.0
    %97 = vmatprep.subr.mxu0 0.0
    %98 = vmatpush2.msra.mxu0 0.0
    %99 = vmatprep.subr.mxu0 0.0
    %100 = vmatpush2.msra.mxu0 0.0
    %101 = vmatprep.subr.mxu0 0.0
    %102 = vmatpush2.msra.mxu0 0.0
    %103 = vmatprep.subr.mxu0 0.0
    %104 = vmatpush2.msra.mxu0 0.0
    %105 = vmatprep.subr.mxu0 0.0
    %106 = vmatpush2.msra.mxu0 0.0
    %107 = vmatprep.subr.mxu0 0.0
    %108 = vmatpush2.msra.mxu0 0.0
    %109 = vmatprep.subr.mxu0 0.0
    %110 = vmatpush2.msra.mxu0 0.0
    %111 = vmatprep.subr.mxu0 0.0
    %112 = vmatpush2.msra.mxu0 0.0
    %113 = vmatprep.subr.mxu0 0.0
    %114 = vmatpush2.msra.mxu0 0.0
    %115 = vmatprep.subr.mxu0 0.0
    %116 = vmatpush2.msra.mxu0 0.0
    %117 = vmatprep.subr.mxu0 0.0
    %118 = vmatpush2.msra.mxu0 0.0
    %119 = vmatprep.subr.mxu0 0.0
    %120 = vmatpush2.msra.mxu0 0.0
    %121 = vmatprep.mubr.f32.mxu0 0.0
    %122 = vmatmul.mubr.f32.gmra.mxu0 %v52
    %v123 = vpop.f32.mrf.mxu0
    %v124 = vadd.f32 0.0, %v123
    %v125 = vpop.f32.mrf.mxu0
    %v126 = vadd.f32 0.0, %v125
    %127 = vmatprep.mubr.f32.mxu0 0.0
    %128 = vmatmul.mubr.f32.gmra.mxu0 %v55
    %v129 = vpop.f32.mrf.mxu0
    %v130 = vadd.f32 0.0, %v129
    %v131 = vpop.f32.mrf.mxu0
    %v132 = vadd.f32 0.0, %v131
    %133 = vdwg.mxu0
    %134 = vst [vmem:[#allocation7] sm:$0xff] %v124
    %135 = vst [vmem:[#allocation7 + $0x8] sm:$0xff] %v126
    %136 = vst [vmem:[#allocation7 + $0x10] sm:$0xff] %v130
    %137 = vst [vmem:[#allocation7 + $0x18] sm:$0xff] %v132
    %s138 = scalar_lea.vmem [#allocation2], 64
    %v139 = vld [vmem:[%s138] sm:$0xff]
    %v140 = vld [vmem:[%s138 + $0x8] sm:$0xff]
    %v141 = vld [vmem:[%s138 + $0x10] sm:$0xff]
    %v142 = vld [vmem:[%s138 + $0x18] sm:$0xff]
    %v143 = vld [vmem:[%s138 + $0x20] sm:$0xff]
    %v144 = vld [vmem:[%s138 + $0x28] sm:$0xff]
    %v145 = vld [vmem:[%s138 + $0x30] sm:$0xff]
    %v146 = vld [vmem:[%s138 + $0x38] sm:$0xff]
    %147 = vmatprep.subr.mxu0 0.0
    %148 = vmatpush1.msra.mxu0 0.0
    %149 = vmatprep.subr.mxu0 0.0
    %150 = vmatpush1.msra.mxu0 0.0
    %151 = vmatprep.subr.mxu0 0.0
    %152 = vmatpush1.msra.mxu0 0.0
    %153 = vmatprep.subr.mxu0 0.0
    %154 = vmatpush1.msra.mxu0 0.0
    %155 = vmatprep.subr.mxu0 0.0
    %156 = vmatpush1.msra.mxu0 0.0
    %157 = vmatprep.subr.mxu0 0.0
    %158 = vmatpush1.msra.mxu0 0.0
    %159 = vmatprep.subr.mxu0 0.0
    %160 = vmatpush1.msra.mxu0 0.0
    %161 = vmatprep.subr.mxu0 0.0
    %162 = vmatpush1.msra.mxu0 0.0
    %163 = vmatprep.subr.mxu0 0.0
    %164 = vmatpush1.msra.mxu0 0.0
    %165 = vmatprep.subr.mxu0 0.0
    %166 = vmatpush1.msra.mxu0 0.0
    %167 = vmatprep.subr.mxu0 0.0
    %168 = vmatpush1.msra.mxu0 0.0
    %169 = vmatprep.subr.mxu0 0.0
    %170 = vmatpush1.msra.mxu0 0.0
    %171 = vmatprep.subr.mxu0 %v146
    %172 = vmatpush1.msra.mxu0 %v145
    %173 = vmatprep.subr.mxu0 %v144
    %174 = vmatpush1.msra.mxu0 %v143
    %175 = vmatprep.subr.mxu0 %v142
    %176 = vmatpush1.msra.mxu0 %v141
    %177 = vmatprep.subr.mxu0 %v140
    %178 = vmatpush1.msra.mxu0 %v139
    %179 = vmatprep.subr.mxu0 0.0
    %180 = vmatpush2.msra.mxu0 0.0
    %181 = vmatprep.subr.mxu0 0.0
    %182 = vmatpush2.msra.mxu0 0.0
    %183 = vmatprep.subr.mxu0 0.0
    %184 = vmatpush2.msra.mxu0 0.0
    %185 = vmatprep.subr.mxu0 0.0
    %186 = vmatpush2.msra.mxu0 0.0
    %187 = vmatprep.subr.mxu0 0.0
    %188 = vmatpush2.msra.mxu0 0.0
    %189 = vmatprep.subr.mxu0 0.0
    %190 = vmatpush2.msra.mxu0 0.0
    %191 = vmatprep.subr.mxu0 0.0
    %192 = vmatpush2.msra.mxu0 0.0
    %193 = vmatprep.subr.mxu0 0.0
    %194 = vmatpush2.msra.mxu0 0.0
    %195 = vmatprep.subr.mxu0 0.0
    %196 = vmatpush2.msra.mxu0 0.0
    %197 = vmatprep.subr.mxu0 0.0
    %198 = vmatpush2.msra.mxu0 0.0
    %199 = vmatprep.subr.mxu0 0.0
    %200 = vmatpush2.msra.mxu0 0.0
    %201 = vmatprep.subr.mxu0 0.0
    %202 = vmatpush2.msra.mxu0 0.0
    %203 = vmatprep.subr.mxu0 0.0
    %204 = vmatpush2.msra.mxu0 0.0
    %205 = vmatprep.subr.mxu0 0.0
    %206 = vmatpush2.msra.mxu0 0.0
    %207 = vmatprep.subr.mxu0 0.0
    %208 = vmatpush2.msra.mxu0 0.0
    %209 = vmatprep.subr.mxu0 0.0
    %210 = vmatpush2.msra.mxu0 0.0
    %211 = vmatprep.mubr.f32.mxu0 0.0
    %212 = vmatmul.mubr.f32.gmra.mxu0 %v52
    %v213 = vpop.f32.mrf.mxu0
    %v214 = vadd.f32 0.0, %v213
    %v215 = vpop.f32.mrf.mxu0
    %v216 = vadd.f32 0.0, %v215
    %217 = vmatprep.mubr.f32.mxu0 0.0
    %218 = vmatmul.mubr.f32.gmra.mxu0 %v55
    %v219 = vpop.f32.mrf.mxu0
    %v220 = vadd.f32 0.0, %v219
    %v221 = vpop.f32.mrf.mxu0
    %v222 = vadd.f32 0.0, %v221
    %223 = vdwg.mxu0
    %s224 = scalar_lea.vmem [#allocation7], 32
    %225 = vst [vmem:[%s224] sm:$0xff] %v214
    %226 = vst [vmem:[%s224 + $0x8] sm:$0xff] %v216
    %227 = vst [vmem:[%s224 + $0x10] sm:$0xff] %v220
    %228 = vst [vmem:[%s224 + $0x18] sm:$0xff] %v222
    // Predicated region
    $region18: #{tpu_custom_call.1} parent=1 // pred_check
      _
    $region19: #{tpu_custom_call.1} parent=1 // pred_check_branch
      %230 = sbr.rel (0) target = $region21
    $region20: #{tpu_custom_call.1} parent=1 // pred_region
      %s232 = ssub.s32 1024, 1024
      %233 = vsyncadd [#allocation4], %s232
      %s234 = sshll.u32 [#allocation7], 4
      %s235 = int_to_ptr.vmem [resolvable:$true] %s234
      %240 = dma.vmem_to_hbm [thread:$0]  %s235, 1024, %s2, [#allocation4], 256, 256, 16
    $region21: #{tpu_custom_call.1} parent=1 // pred_fallthru
      _
    // Predicated region
    $region22: #{tpu_custom_call.1} parent=1 // pred_check
      _
    $region23: #{tpu_custom_call.1} parent=1 // pred_check_branch
      %242 = sbr.rel (0) target = $region25
    $region24: #{tpu_custom_call.1} parent=1 // pred_region
      %243 = dma.done [#allocation4], 1024
    $region25: #{tpu_custom_call.1} parent=1 // pred_fallthru
      _
    %244 = vsyncpa [#allocation3], 1
    %245 = vsyncpa [#allocation6], 1
    %246 = vsyncpa [#allocation4], 1

</llo_original>
